<compile_context>
chip_gen: v5e
topology: v5e:2x2
jax: 0.10.0
libtpu: 0.0.40
codegen_flags: <defaults>
</compile_context>

<pallas_src>
import jax
import jax.numpy as jnp
from jax.experimental import pallas as pl
from jax.experimental.pallas import tpu as pltpu
import numpy as np


def _additive_attn_kernel(x_ref, w_ref, b_ref, v_ref, out_ref):
    # x_ref:   (tr, E)  tr = bt * S flattened rows of (B*S, E)
    # w_ref:   (E, D)   proj.weight^T           (resident, constant index map)
    # b_ref:   (1, D)   proj.bias               (f32)
    # v_ref:   (1, D)   proj_v.weight row       (f32)
    # out_ref: (bt, S)  softmax over S, lane-dense
    bt, s_len = out_ref.shape
    d = w_ref.shape[1]

    # One big MXU matmul for the whole row tile (f32 accumulate even for bf16 operands).
    h = jnp.tanh(
        jnp.dot(x_ref[...], w_ref[...], preferred_element_type=jnp.float32)
        + b_ref[...]
    )                                                              # (tr, D) f32

    # proj_v as a VPU multiply + lane reduce on the (bt, S, D) view: produces the
    # (bt, S) scores lane-dense directly (single relayout handled by Mosaic).
    h3 = h.reshape(bt, s_len, d)                                   # (bt, S, D)
    scores = jnp.sum(h3 * v_ref[...], axis=-1)                     # (bt, S) f32

    # Softmax over the sequence (lane) axis.
    m = jnp.max(scores, axis=-1, keepdims=True)                    # (bt, 1)
    e = jnp.exp(scores - m)                                        # (bt, S)
    denom = jnp.sum(e, axis=-1, keepdims=True)                     # (bt, 1)
    r = pl.reciprocal(denom, approx=True)                          # EUP slot
    r = r * (2.0 - denom * r)                                      # Newton step -> f32 accuracy
    out_ref[...] = (e * r).astype(out_ref.dtype)


def _vmem_capacity_bytes():
    try:
        return int(pltpu.get_tpu_info().vmem_capacity_bytes)
    except Exception:
        return 64 << 20  # conservative fallback: v7x per-TensorCore VMEM


def _step_vmem_bytes(bt, s, e, d, in_itemsize):
    """Rough per-grid-step VMEM footprint, including pipeline double-buffering."""
    x_tile = bt * s * e * in_itemsize * 2          # input tile, double-buffered
    out_tile = bt * s * 4 * 2                      # output tile, double-buffered
    weights = (e * d + 2 * d) * in_itemsize * 2    # W / bias / v (constant index map)
    h_tmp = bt * s * d * 4 * 3                     # h, h*v product, exp temporaries
    return x_tile + out_tile + weights + h_tmp


def _pick_tiling(batch, s, e, d, budget_bytes, in_itemsize):
    """Return (bt, grid_steps, padded_batch).

    bt is either the full (possibly padded) batch, or a multiple of 8 so the (bt, S)
    output block and (bt*S, E) input block satisfy the (8, 128) tiling rule.  We prefer
    >= 2 grid steps when a legal split fits, so the "parallel" batch axis can be sharded
    across both TensorCores on v7x.
    """
    b_pad8 = -(-batch // 8) * 8
    # Largest multiple-of-8 divisor of the padded batch that fits and gives >= 2 steps.
    bt = (b_pad8 // 2) // 8 * 8
    while bt >= 8:
        if b_pad8 % bt == 0 and _step_vmem_bytes(bt, s, e, d, in_itemsize) <= budget_bytes:
            return bt, b_pad8 // bt, b_pad8
        bt -= 8
    # Whole batch in a single step (full-dim blocks are always legal), if it fits.
    if _step_vmem_bytes(batch, s, e, d, in_itemsize) <= budget_bytes:
        return batch, 1, batch
    # Minimal legal tile.
    # TODO(synk): tile the sequence axis with an online softmax for huge S*E.
    return 8, b_pad8 // 8, b_pad8


def additive_attention(x, w_t, bias, v_row, *, use_bf16_inputs=False):
    """x: (B, S, E), w_t: (E, D), bias: (D,), v_row: (1, D) -> (B, S) attention probs."""
    B, S, E = x.shape
    D = w_t.shape[1]

    in_dtype = jnp.bfloat16 if use_bf16_inputs else jnp.float32
    in_itemsize = 2 if use_bf16_inputs else 4

    cap = _vmem_capacity_bytes()
    budget = int(cap * 0.45)  # headroom for compiler scratch / pipelining
    bt, steps, b_pad = _pick_tiling(B, S, E, D, budget, in_itemsize)

    if b_pad != B:
        x = jnp.pad(x, ((0, b_pad - B), (0, 0), (0, 0)))
    x2 = x.reshape(b_pad * S, E).astype(in_dtype)      # flatten rows; lane (E) layout kept
    w_in = w_t.astype(in_dtype)
    bias2 = bias.reshape(1, D).astype(jnp.float32)
    v2 = v_row.reshape(1, D).astype(jnp.float32)

    tr = bt * S
    footprint = _step_vmem_bytes(bt, S, E, D, in_itemsize)
    vmem_limit = int(min(0.9 * cap, max(2 * footprint, 32 << 20)))

    cost = pl.CostEstimate(
        flops=2 * b_pad * S * E * D + 4 * b_pad * S * D,
        transcendentals=b_pad * S * D + b_pad * S,
        bytes_accessed=x2.size * in_itemsize + w_in.size * in_itemsize
        + 2 * D * 4 + b_pad * S * 4,
    )

    out = pl.pallas_call(
        _additive_attn_kernel,
        out_shape=jax.ShapeDtypeStruct((b_pad, S), jnp.float32),
        grid_spec=pltpu.PrefetchScalarGridSpec(
            num_scalar_prefetch=0,
            grid=(steps,),
            in_specs=[
                pl.BlockSpec((tr, E), lambda i: (i, 0)),   # row tile of flattened x
                pl.BlockSpec((E, D), lambda i: (0, 0)),    # resident weights
                pl.BlockSpec((1, D), lambda i: (0, 0)),
                pl.BlockSpec((1, D), lambda i: (0, 0)),
            ],
            out_specs=pl.BlockSpec((bt, S), lambda i: (i, 0)),  # lane-dense (bt, S)
        ),
        compiler_params=pltpu.CompilerParams(
            dimension_semantics=("parallel",),
            vmem_limit_bytes=vmem_limit,
        ),
        cost_estimate=cost,
    )(x2, w_in, bias2, v2)

    return out[:B] if b_pad != B else out


def _reference(x, w_t, bias, v_row):
    h = jnp.tanh(jnp.einsum("bse,ed->bsd", x, w_t) + bias)
    scores = jnp.sum(h * v_row, axis=-1)          # (B, S)
    return jax.nn.softmax(scores, axis=1)


if __name__ == "__main__":
    # Small shapes consistent with the module: embed_dim=32, output_dim=16, B=2, S=8.
    B, S, E, D = 2, 8, 32, 16
    key = jax.random.PRNGKey(0)
    kx, kw, kb, kv = jax.random.split(key, 4)

    # Deterministic parameter init (module __init__ semantics):
    #   proj.weight: xavier_normal_ -> std = sqrt(2 / (fan_in + fan_out))
    #   proj.bias:   default Linear init U(-1/sqrt(fan_in), 1/sqrt(fan_in))
    #   proj_v.weight: default Linear init (no bias)
    xavier_std = float(np.sqrt(2.0 / (E + D)))
    proj_w = jax.random.normal(kw, (D, E), dtype=jnp.float32) * xavier_std  # torch (out, in)
    bbound = 1.0 / float(np.sqrt(E))
    proj_b = jax.random.uniform(kb, (D,), minval=-bbound, maxval=bbound, dtype=jnp.float32)
    vbound = 1.0 / float(np.sqrt(D))
    proj_v_w = jax.random.uniform(kv, (1, D), minval=-vbound, maxval=vbound, dtype=jnp.float32)

    # Kernel consumes pre-transposed proj weight and the v row directly.
    w_t = proj_w.T            # (E, D)
    v_row = proj_v_w          # (1, D)

    x = jax.random.normal(kx, (B, S, E), dtype=jnp.float32)

    out = additive_attention(x, w_t, proj_b, v_row)  # f32 path (use_bf16_inputs=True on v6e/v7x)
    out = jax.block_until_ready(out)

    ref = _reference(x, w_t, proj_b, v_row)
    assert out.shape == (B, S)
    np.testing.assert_allclose(np.asarray(out), np.asarray(ref), rtol=1e-5, atol=1e-5)
    print("KERNEL_OK")
</pallas_src>

<mosaic_0001>
module attributes {stable_mosaic.version = 11 : i64} {
  func.func @_additive_attn_kernel(%arg0: i32, %arg1: memref<16x32xf32, #tpu.memory_space<vmem>>, %arg2: memref<32x16xf32, #tpu.memory_space<vmem>>, %arg3: memref<1x16xf32, #tpu.memory_space<vmem>>, %arg4: memref<1x16xf32, #tpu.memory_space<vmem>>, %arg5: memref<2x8xf32, #tpu.memory_space<vmem>>) attributes {dimension_semantics = [#tpu.dimension_semantics<parallel>], iteration_bounds = array<i64: 1>, scalar_prefetch = 0 : i64, scratch_operands = 0 : i64, tpu.core_type = #tpu.core_type<tc>, window_params = [{transform_indices = @transform_0, window_bounds = array<i64: 16, 32>}, {pipeline_mode = #tpu.pipeline_mode<synchronous>, transform_indices = @transform_1, window_bounds = array<i64: 32, 16>}, {pipeline_mode = #tpu.pipeline_mode<synchronous>, transform_indices = @transform_2, window_bounds = array<i64: 1, 16>}, {pipeline_mode = #tpu.pipeline_mode<synchronous>, transform_indices = @transform_3, window_bounds = array<i64: 1, 16>}, {transform_indices = @transform_4, window_bounds = array<i64: 2, 8>}]} {
    %c0 = arith.constant 0 : index
    %c0_0 = arith.constant 0 : index
    %0 = vector.load %arg1[%c0, %c0_0] : memref<16x32xf32, #tpu.memory_space<vmem>>, vector<16x32xf32>
    %c0_1 = arith.constant 0 : index
    %c0_2 = arith.constant 0 : index
    %1 = vector.load %arg2[%c0_1, %c0_2] : memref<32x16xf32, #tpu.memory_space<vmem>>, vector<32x16xf32>
    %cst = arith.constant dense<0.000000e+00> : vector<16x16xf32>
    %2 = tpu.matmul %0, %1, %cst {dimension_numbers = #tpu.dot_dimension_numbers<[1], [0], [0], [1], [0, 0, 1, 1], [], []>} : vector<16x32xf32>, vector<32x16xf32>, vector<16x16xf32> -> vector<16x16xf32>
    %c0_3 = arith.constant 0 : index
    %c0_4 = arith.constant 0 : index
    %3 = vector.load %arg3[%c0_3, %c0_4] : memref<1x16xf32, #tpu.memory_space<vmem>>, vector<1x16xf32>
    %4 = vector.broadcast %3 : vector<1x16xf32> to vector<16x16xf32>
    %5 = arith.addf %2, %4 : vector<16x16xf32>
    %6 = math.tanh %5 : vector<16x16xf32>
    %7 = vector.shape_cast %6 : vector<16x16xf32> to vector<2x8x16xf32>
    %c0_5 = arith.constant 0 : index
    %c0_6 = arith.constant 0 : index
    %8 = vector.load %arg4[%c0_5, %c0_6] : memref<1x16xf32, #tpu.memory_space<vmem>>, vector<1x16xf32>
    %9 = vector.shape_cast %8 : vector<1x16xf32> to vector<1x1x16xf32>
    %10 = vector.broadcast %9 : vector<1x1x16xf32> to vector<2x8x16xf32>
    %11 = arith.mulf %7, %10 : vector<2x8x16xf32>
    %cst_7 = arith.constant dense<0.000000e+00> : vector<2x8xf32>
    %12 = vector.multi_reduction <add>, %11, %cst_7 [2] : vector<2x8x16xf32> to vector<2x8xf32>
    %cst_8 = arith.constant dense<0xFF800000> : vector<2xf32>
    %13 = vector.multi_reduction <maximumf>, %12, %cst_8 [1] : vector<2x8xf32> to vector<2xf32>
    %14 = vector.shape_cast %13 : vector<2xf32> to vector<2x1xf32>
    %15 = vector.broadcast %14 : vector<2x1xf32> to vector<2x8xf32>
    %16 = arith.subf %12, %15 : vector<2x8xf32>
    %17 = math.exp %16 : vector<2x8xf32>
    %cst_9 = arith.constant dense<0.000000e+00> : vector<2xf32>
    %18 = vector.multi_reduction <add>, %17, %cst_9 [1] : vector<2x8xf32> to vector<2xf32>
    %19 = vector.shape_cast %18 : vector<2xf32> to vector<2x1xf32>
    %20 = tpu.reciprocal %19 {approx = true} : vector<2x1xf32> -> vector<2x1xf32>
    %21 = arith.mulf %19, %20 : vector<2x1xf32>
    %cst_10 = arith.constant 2.000000e+00 : f32
    %22 = vector.broadcast %cst_10 : f32 to vector<2x1xf32>
    %23 = arith.subf %22, %21 : vector<2x1xf32>
    %24 = arith.mulf %20, %23 : vector<2x1xf32>
    %25 = vector.broadcast %24 : vector<2x1xf32> to vector<2x8xf32>
    %26 = arith.mulf %17, %25 : vector<2x8xf32>
    %c0_11 = arith.constant 0 : index
    %c0_12 = arith.constant 0 : index
    %27 = vector.load %arg5[%c0_11, %c0_12] : memref<2x8xf32, #tpu.memory_space<vmem>>, vector<2x8xf32>
    tpu.vector_store %arg5[%c0_11, %c0_12], %26 {strides = array<i32>} : memref<2x8xf32, #tpu.memory_space<vmem>>, vector<2x8xf32>,
    return
  }
  func.func @transform_0(%arg0: i32) -> (i32, i32) {
    %c0_i32 = arith.constant 0 : i32
    %c0_i32_0 = arith.constant 0 : i32
    return %arg0, %c0_i32 : i32, i32
  }
  func.func @transform_1(%arg0: i32) -> (i32, i32) {
    %c0_i32 = arith.constant 0 : i32
    %c0_i32_0 = arith.constant 0 : i32
    %c0_i32_1 = arith.constant 0 : i32
    return %c0_i32, %c0_i32_0 : i32, i32
  }
  func.func @transform_2(%arg0: i32) -> (i32, i32) {
    %c0_i32 = arith.constant 0 : i32
    %c0_i32_0 = arith.constant 0 : i32
    %c0_i32_1 = arith.constant 0 : i32
    return %c0_i32, %c0_i32_0 : i32, i32
  }
  func.func @transform_3(%arg0: i32) -> (i32, i32) {
    %c0_i32 = arith.constant 0 : i32
    %c0_i32_0 = arith.constant 0 : i32
    %c0_i32_1 = arith.constant 0 : i32
    return %c0_i32, %c0_i32_0 : i32, i32
  }
  func.func @transform_4(%arg0: i32) -> (i32, i32) {
    %c0_i32 = arith.constant 0 : i32
    %c0_i32_0 = arith.constant 0 : i32
    return %arg0, %c0_i32 : i32, i32
  }
}

</mosaic_0001>

<llo_original>
// kernel: tpu_custom_call.1
$region0: #{tpu_custom_call.1}
  #allocation0 [shape = 'u32[]', space=smem, size = 0x4, offset = 0x4, fixed_abs, tag = 'smem constant byte address 0x4 - core index']
  #allocation1 [shape = 'u32[72,128]{1,0:T(1,128)}', space=vmem, size = 0x9000, scoped, tag = 'internal scratch']
  %s0 = inlined_call_operand.vmem [shape: f32[16,32], index: 0, kind: input, shape index: {}]
  %s1 = inlined_call_operand.vmem [shape: f32[32,16], index: 1, kind: input, shape index: {}]
  %s2 = inlined_call_operand.vmem [shape: f32[1,16], index: 2, kind: input, shape index: {}]
  %s3 = inlined_call_operand.vmem [shape: f32[1,16], index: 3, kind: input, shape index: {}]
  %s4 = inlined_call_operand.hbm [shape: f32[2,8], index: 4, kind: output, shape index: {}]
  %s5 = sld [smem:[#allocation0]]
  $region26: #{tpu_custom_call.1} parent=0
    _
  %s7 = ssub.s32 1, %s5
  %s8 = scalar_select 0, %s7, %s5
  $region1: #{tpu_custom_call.1} parent=0
    #allocation2 [shape = 'u8[1024]{0}', space=vmem, size = 0x400, scoped, tag = 'output window, operand 0, single buffered']
    #allocation3 [shape = 's32[1]{0}', space=sflag, size = 0x4, scoped, tag = 'scoped memory for tpu_custom_call.1']
    %9 = vsyncpa [#allocation3], 0
    // Predicated region
    $region2: #{tpu_custom_call.1} parent=1 // pred_check
      _
    $region3: #{tpu_custom_call.1} parent=1 // pred_check_branch
      %11 = sbr.rel (0) target = $region5
    $region4: #{tpu_custom_call.1} parent=1 // pred_region
      _
    $region5: #{tpu_custom_call.1} parent=1 // pred_fallthru
      _
    // Predicated region
    $region6: #{tpu_custom_call.1} parent=1 // pred_check
      _
    $region7: #{tpu_custom_call.1} parent=1 // pred_check_branch
      %13 = sbr.rel (0) target = $region9
    $region8: #{tpu_custom_call.1} parent=1 // pred_region
      _
    $region9: #{tpu_custom_call.1} parent=1 // pred_fallthru
      _
    // Predicated region
    $region10: #{tpu_custom_call.1} parent=1 // pred_check
      _
    $region11: #{tpu_custom_call.1} parent=1 // pred_check_branch
      %15 = sbr.rel (0) target = $region13
    $region12: #{tpu_custom_call.1} parent=1 // pred_region
      _
    $region13: #{tpu_custom_call.1} parent=1 // pred_fallthru
      _
    // Predicated region
    $region14: #{tpu_custom_call.1} parent=1 // pred_check
      _
    $region15: #{tpu_custom_call.1} parent=1 // pred_check_branch
      %17 = sbr.rel (0) target = $region17
    $region16: #{tpu_custom_call.1} parent=1 // pred_region
      _
    $region17: #{tpu_custom_call.1} parent=1 // pred_fallthru
      _
    %v18 = vld [vmem:[%s0] sm:$0xff]
    %v19 = vld [vmem:[%s0 + $0x8] sm:$0xff]
    %v20 = vld [vmem:[%s1] sm:$0xff]
    %v21 = vld [vmem:[%s1 + $0x8] sm:$0xff]
    %v22 = vld [vmem:[%s1 + $0x10] sm:$0xff]
    %v23 = vld [vmem:[%s1 + $0x18] sm:$0xff]
    %v24 = vld [vmem:[%s2] sm:$0x1]
    %v26 = vperm.slane %v24, 0
    %vm28 = vcmask 261120
    %v30 = vsel %vm28, %v18, 0
    %v33 = vsel %vm28, %v19, 0
    %35 = vmatpush.msra.mxu0 0.0
    %36 = vmatpush.msra.mxu0 0.0
    %37 = vmatpush.msra.mxu0 0.0
    %38 = vmatpush.msra.mxu0 0.0
    %39 = vmatpush.msra.mxu0 0.0
    %40 = vmatpush.msra.mxu0 0.0
    %41 = vmatpush.msra.mxu0 0.0
    %42 = vmatpush.msra.mxu0 0.0
    %43 = vmatpush.msra.mxu0 0.0
    %44 = vmatpush.msra.mxu0 0.0
    %45 = vmatpush.msra.mxu0 0.0
    %46 = vmatpush.msra.mxu0 0.0
    %47 = vmatpush.msra.mxu0 %v23
    %48 = vmatpush.msra.mxu0 %v22
    %49 = vmatpush.msra.mxu0 %v21
    %50 = vmatpush.msra.mxu0 %v20
    %51 = vmatmul.f32.gmra.mxu0 %v30
    %v52 = vpop.f32.mrf.mxu0
    %v53 = vadd.f32 %v26, %v52
    %54 = vmatmul.f32.gmra.mxu0 %v33
    %v55 = vpop.f32.mrf.mxu0
    %v56 = vadd.f32 %v26, %v55
    %57 = vdwg.mxu0
    %v58 = vtanh.pop %v53
    %v59 = vtanh.pop %v56
    %v60 = vld [vmem:[%s3] sm:$0x1]
    %v62 = vperm.slane %v60, 0
    %v64 = vmul.f32 %v58, %v62
    %v65 = vmul.f32 %v59, %v62
    %vm66 = vcmask 130048
    %v67 = vsel %vm66, %v64, 0.0
    %68 = vadd.xlane.f32.xlu0 %v67
    %v69 = vpop.xlane.xlu0 %68
    %v70 = vsel %vm66, %v65, 0.0
    %71 = vadd.xlane.f32.xlu0 %v70
    %v72 = vpop.xlane.xlu0 %71
    %v75 = vlaneseq
    %v76 = vand.u32 %v75, 127
    %v77 = vperm.slane %v69, %v76
    %v78 = vperm.slane %v72, %v76
    %vm79 = vcmask 1041409
    %v80 = vsel %vm79, %v78, %v77
    %vm82 = vcmask 58368
    %v83 = vsel %vm82, %v80, -inf
    %84 = vmax.xlane.f32.xlu0 %v83
    %v85 = vpop.xlane.xlu0 %84
    %v87 = vperm.slane %v85, 0
    %v88 = vperm.slane %v85, 1
    %v91 = vsub.f32 %v69, %v87
    %v92 = vsub.f32 %v72, %v88
    %v93 = vmul.f32 %v91, 1.442695
    %v94 = vpow.pop %v93
    %v95 = vmul.f32 %v92, 1.442695
    %v96 = vpow.pop %v95
    %99 = vset.pattern.permute.xlu0 0
    %100 = vperm.xlu0 %99, %v94
    %v101 = vpop.permute.xlu0 %100
    %102 = vset.pattern.permute.xlu0 0
    %103 = vperm.xlu0 %102, %v96
    %v104 = vpop.permute.xlu0 %103
    %v105 = vperm.slane %v101, %v76
    %v106 = vperm.slane %v104, %v76
    %v107 = vsel %vm79, %v106, %v105
    %v109 = vsel %vm82, %v107, 0.0
    %110 = vadd.xlane.f32.xlu0 %v109
    %v111 = vpop.xlane.xlu0 %110
    %v112 = vrcp.pop %v111
    %v113 = vmul.f32 %v111, %v112
    %v114 = vsub.f32 2.0, %v113
    %v115 = vmul.f32 %v112, %v114
    %v117 = vperm.slane %v115, 0
    %v118 = vperm.slane %v115, 1
    %v121 = vmul.f32 %v94, %v117
    %v122 = vmul.f32 %v96, %v118
    %125 = vset.pattern.permute.xlu0 0
    %126 = vperm.xlu0 %125, %v121
    %v127 = vpop.permute.xlu0 %126
    %128 = vset.pattern.permute.xlu0 0
    %129 = vperm.xlu0 %128, %v122
    %v130 = vpop.permute.xlu0 %129
    %v131 = vperm.slane %v127, %v76
    %v132 = vperm.slane %v130, %v76
    %v133 = vsel %vm79, %v132, %v131
    %135 = vst.msk [vmem:[#allocation2] sm:$0x3] %vm82, %v133
    // Predicated region
    $region18: #{tpu_custom_call.1} parent=1 // pred_check
      _
    $region19: #{tpu_custom_call.1} parent=1 // pred_check_branch
      %137 = sbr.rel (0) target = $region21
    $region20: #{tpu_custom_call.1} parent=1 // pred_region
      %139 = vsyncadd [#allocation3], 0
      %s141 = sshll.u32 [#allocation2], 4
      %s142 = int_to_ptr.vmem [resolvable:$true] %s141
      %s143 = sshll.u32 %s4, 4
      %s144 = int_to_ptr.hbm [resolvable:$true] %s143
      %146 = dma.vmem_to_hbm [thread:$0]  %s142, 32, %s144, [#allocation3]
    $region21: #{tpu_custom_call.1} parent=1 // pred_fallthru
      _
    // Predicated region
    $region22: #{tpu_custom_call.1} parent=1 // pred_check
      _
    $region23: #{tpu_custom_call.1} parent=1 // pred_check_branch
      %148 = sbr.rel (0) target = $region25
    $region24: #{tpu_custom_call.1} parent=1 // pred_region
      %150 = dma.done [#allocation3], 32
    $region25: #{tpu_custom_call.1} parent=1 // pred_fallthru
      _
    %151 = vsyncpa [#allocation3], 1

</llo_original>
